<compile_context>
chip_gen: v7x
topology: tpu7x:2x2x1
jax: 0.10.0
libtpu: 0.0.40
codegen_flags: <defaults>
</compile_context>

<pallas_src>
import math

import jax
import jax.numpy as jnp
from jax.experimental import pallas as pl
from jax.experimental.pallas import tpu as pltpu


def add_bias_kernel(x_ref, bias_ref, o_ref):
    """Pure VPU broadcast-add: o = x + bias.

    x_ref    : (TILE_ROWS, LANE)  streaming input tile
    bias_ref : (1, LANE)          precomputed Linear(Emb(t)) bias, VMEM-resident
    o_ref    : (TILE_ROWS, LANE)  output tile
    """
    o_ref[...] = x_ref[...] + bias_ref[...].astype(o_ref.dtype)


def build_emb_table(n_hid: int, max_len: int = 100) -> jnp.ndarray:
    """Frozen sinusoidal embedding table, identical to the PyTorch __init__."""
    position = jnp.arange(0.0, max_len, dtype=jnp.float32)[:, None]        # (max_len, 1)
    div_term = jnp.exp(jnp.arange(0, n_hid, 2, dtype=jnp.float32)
                       * -(math.log(10000.0) / n_hid))                      # (n_hid//2,)
    sin_part = jnp.sin(position * div_term) / math.sqrt(n_hid)
    cos_part = jnp.cos(position * div_term) / math.sqrt(n_hid)
    emb = jnp.zeros((max_len, n_hid), dtype=jnp.float32)
    emb = emb.at[:, 0::2].set(sin_part)
    emb = emb.at[:, 1::2].set(cos_part)
    return emb


def rel_temporal_encoding(x, t, rte_ratio, emb_table, w, b, *, tile_rows_max=512):
    """x: (B, L, H), t: python int timestep. Returns x + lin(emb(t*ratio))."""
    B, L, H = x.shape
    max_len = emb_table.shape[0]

    # Explicit bounds check (torch.nn.Embedding would raise; dynamic_slice clamps).
    idx = int(t) * int(rte_ratio)
    if not (0 <= idx < max_len):
        raise ValueError(f"t * RTE_ratio = {idx} out of range [0, {max_len})")

    # --- glue: tiny (1,H)@(H,H) GEMV done once in the wrapper (MXU waste in-kernel) ---
    e_row = emb_table[idx]                                   # (H,)
    bias = (e_row @ w.T + b).astype(jnp.float32)             # (H,)

    # --- lane-dense 2D view of x ---
    total = B * L * H
    if H < 128 and 128 % H == 0 and total % 128 == 0:
        lane = 128
        bias2 = jnp.tile(bias, 128 // H).reshape(1, lane)    # bias repeats per H-chunk
    else:
        lane = H                                             # full last dim: legal block
        bias2 = bias.reshape(1, lane)
    rows = total // lane
    x2 = x.reshape(rows, lane)

    # --- row tiling: biggest tile that comfortably double-buffers on all gens ---
    tile_rows = rows if rows <= tile_rows_max else tile_rows_max   # full-extent or mult-of-8
    grid = (pl.cdiv(rows, tile_rows),)

    itemsize = jnp.dtype(x.dtype).itemsize
    out2 = pl.pallas_call(
        add_bias_kernel,
        out_shape=jax.ShapeDtypeStruct((rows, lane), x.dtype),
        grid=grid,
        in_specs=[
            pl.BlockSpec((tile_rows, lane), lambda i: (i, 0)),   # x tile (streamed)
            pl.BlockSpec((1, lane), lambda i: (0, 0)),           # bias (resident)
        ],
        out_specs=pl.BlockSpec((tile_rows, lane), lambda i: (i, 0)),
        compiler_params=pltpu.CompilerParams(
            dimension_semantics=("parallel",),                   # shard rows across TCs (v7x)
            vmem_limit_bytes=32 * 1024 * 1024,
        ),
        cost_estimate=pl.CostEstimate(
            flops=total,
            transcendentals=0,
            bytes_accessed=2 * total * itemsize + lane * 4,
        ),
    )(x2, bias2)

    return out2.reshape(B, L, H)


if __name__ == "__main__":
    # Small shapes consistent with the forward pass: x (B, L, H), scalar t.
    B, L, H = 2, 8, 32
    RTE_RATIO = 2
    MAX_LEN = 100
    t = 3

    key = jax.random.PRNGKey(0)
    kx, kw, kb = jax.random.split(key, 3)

    x = jax.random.normal(kx, (B, L, H), dtype=jnp.float32)
    # Deterministic Linear(n_hid, n_hid) params (synthetic, no checkpoint).
    w = jax.random.normal(kw, (H, H), dtype=jnp.float32) / math.sqrt(H)  # (out, in)
    b = jax.random.normal(kb, (H,), dtype=jnp.float32) * 0.01

    emb_table = build_emb_table(H, MAX_LEN)

    out = rel_temporal_encoding(x, t, RTE_RATIO, emb_table, w, b)
    out = jax.block_until_ready(out)

    # Pure-JAX reference for sanity.
    e_ref = emb_table[t * RTE_RATIO]
    ref = x + (e_ref @ w.T + b)[None, None, :]
    assert out.shape == (B, L, H)
    assert jnp.allclose(out, ref, atol=1e-5, rtol=1e-5), "mismatch vs reference"

    print("KERNEL_OK")
</pallas_src>

<mosaic_0001>
module attributes {stable_mosaic.version = 11 : i64} {
  func.func @add_bias_kernel(%arg0: i32, %arg1: memref<4x128xf32, #tpu.memory_space<vmem>>, %arg2: memref<1x128xf32, #tpu.memory_space<vmem>>, %arg3: memref<4x128xf32, #tpu.memory_space<vmem>>) attributes {dimension_semantics = [#tpu.dimension_semantics<parallel>], iteration_bounds = array<i64: 1>, scalar_prefetch = 0 : i64, scratch_operands = 0 : i64, tpu.core_type = #tpu.core_type<tc>, window_params = [{transform_indices = @transform_0, window_bounds = array<i64: 4, 128>}, {pipeline_mode = #tpu.pipeline_mode<synchronous>, transform_indices = @transform_1, window_bounds = array<i64: 1, 128>}, {transform_indices = @transform_2, window_bounds = array<i64: 4, 128>}]} {
    %c0 = arith.constant 0 : index
    %c0_0 = arith.constant 0 : index
    %0 = vector.load %arg1[%c0, %c0_0] : memref<4x128xf32, #tpu.memory_space<vmem>>, vector<4x128xf32>
    %c0_1 = arith.constant 0 : index
    %c0_2 = arith.constant 0 : index
    %1 = vector.load %arg2[%c0_1, %c0_2] : memref<1x128xf32, #tpu.memory_space<vmem>>, vector<1x128xf32>
    %2 = vector.broadcast %1 : vector<1x128xf32> to vector<4x128xf32>
    %3 = arith.addf %0, %2 : vector<4x128xf32>
    %c0_3 = arith.constant 0 : index
    %c0_4 = arith.constant 0 : index
    %4 = vector.load %arg3[%c0_3, %c0_4] : memref<4x128xf32, #tpu.memory_space<vmem>>, vector<4x128xf32>
    tpu.vector_store %arg3[%c0_3, %c0_4], %3 {strides = array<i32>} : memref<4x128xf32, #tpu.memory_space<vmem>>, vector<4x128xf32>,
    return
  }
  func.func @transform_0(%arg0: i32) -> (i32, i32) {
    %c0_i32 = arith.constant 0 : i32
    %c0_i32_0 = arith.constant 0 : i32
    return %arg0, %c0_i32 : i32, i32
  }
  func.func @transform_1(%arg0: i32) -> (i32, i32) {
    %c0_i32 = arith.constant 0 : i32
    %c0_i32_0 = arith.constant 0 : i32
    %c0_i32_1 = arith.constant 0 : i32
    return %c0_i32, %c0_i32_0 : i32, i32
  }
  func.func @transform_2(%arg0: i32) -> (i32, i32) {
    %c0_i32 = arith.constant 0 : i32
    %c0_i32_0 = arith.constant 0 : i32
    return %arg0, %c0_i32 : i32, i32
  }
}

</mosaic_0001>

<llo_original>
// kernel: tpu_custom_call.1
$region0: #{tpu_custom_call.1}
  #allocation0 [shape = 'u32[]', space=smem, size = 0x4, offset = 0x4, fixed_abs, tag = 'smem constant byte address 0x4 - core index']
  #allocation1 [shape = 'u32[144,128]{1,0:T(1,128)}', space=vmem, size = 0x12000, scoped, tag = 'internal scratch']
  %s0 = inlined_call_operand.hbm [shape: f32[4,128], index: 0, kind: input, shape index: {}]
  %s1 = inlined_call_operand.vmem [shape: f32[1,128], index: 1, kind: input, shape index: {}]
  %s2 = inlined_call_operand.hbm [shape: f32[4,128], index: 2, kind: output, shape index: {}]
  %s3 = sld [smem:[#allocation0]]
  $region22: #{tpu_custom_call.1} parent=0
    _
  %s5 = ssub.s32 1, %s3
  %s6 = scalar_select 0, %s5, %s3
  $region1: #{tpu_custom_call.1} parent=0
    #allocation2 [shape = 'u8[2048]{0}', space=vmem, size = 0x800, scoped, tag = 'input window, operand 0, single buffered']
    #allocation3 [shape = 's32[1]{0}', space=sflag, size = 0x4, scoped, tag = 'scoped memory for tpu_custom_call.1']
    #allocation4 [shape = 's32[1]{0}', space=sflag, size = 0x4, scoped, tag = 'scoped memory for tpu_custom_call.1']
    #allocation5 [shape = 'u8[2048]{0}', space=vmem, size = 0x800, scoped, tag = 'output window, operand 0, single buffered']
    %7 = vsyncpa [#allocation3], 0
    %8 = vsyncpa [#allocation4], 0
    // Predicated region
    $region2: #{tpu_custom_call.1} parent=1 // pred_check
      _
    $region3: #{tpu_custom_call.1} parent=1 // pred_check_branch
      %10 = sbr.rel (0) target = $region5
    $region4: #{tpu_custom_call.1} parent=1 // pred_region
      %s12 = ssub.s32 64, 64
      %13 = vsyncadd [#allocation3], %s12
      %s15 = sshll.u32 [#allocation2], 4
      %s16 = int_to_ptr.vmem [resolvable:$true] %s15
      %18 = dma.hbm_to_vmem [thread:$0]  %s0, 64, %s16, [#allocation3]
    $region5: #{tpu_custom_call.1} parent=1 // pred_fallthru
      _
    // Predicated region
    $region6: #{tpu_custom_call.1} parent=1 // pred_check
      _
    $region7: #{tpu_custom_call.1} parent=1 // pred_check_branch
      %20 = sbr.rel (0) target = $region9
    $region8: #{tpu_custom_call.1} parent=1 // pred_region
      _
    $region9: #{tpu_custom_call.1} parent=1 // pred_fallthru
      _
    // Predicated region
    $region10: #{tpu_custom_call.1} parent=1 // pred_check
      _
    $region11: #{tpu_custom_call.1} parent=1 // pred_check_branch
      %22 = sbr.rel (0) target = $region13
    $region12: #{tpu_custom_call.1} parent=1 // pred_region
      %23 = dma.done [#allocation3], 64
    $region13: #{tpu_custom_call.1} parent=1 // pred_fallthru
      _
    %v24 = vld [vmem:[#allocation2] sm:$0xf]
    %v25 = vld [vmem:[%s1] sm:$0x1]
    %v27 = vlaneseq
    %v28 = vshrl.u32 %v27, 7
    %v29 = vsub.s32 0, %v28
    %v30 = vrot.slane %v25, %v29
    %v32 = vadd.f32 %v24, %v30
    %33 = vst [vmem:[#allocation5] sm:$0xf] %v32
    // Predicated region
    $region14: #{tpu_custom_call.1} parent=1 // pred_check
      _
    $region15: #{tpu_custom_call.1} parent=1 // pred_check_branch
      %35 = sbr.rel (0) target = $region17
    $region16: #{tpu_custom_call.1} parent=1 // pred_region
      %s37 = ssub.s32 64, 64
      %38 = vsyncadd [#allocation4], %s37
      %s40 = sshll.u32 [#allocation5], 4
      %s41 = int_to_ptr.vmem [resolvable:$true] %s40
      %43 = dma.vmem_to_hbm [thread:$0]  %s41, 64, %s2, [#allocation4]
    $region17: #{tpu_custom_call.1} parent=1 // pred_fallthru
      _
    // Predicated region
    $region18: #{tpu_custom_call.1} parent=1 // pred_check
      _
    $region19: #{tpu_custom_call.1} parent=1 // pred_check_branch
      %45 = sbr.rel (0) target = $region21
    $region20: #{tpu_custom_call.1} parent=1 // pred_region
      %46 = dma.done [#allocation4], 64
    $region21: #{tpu_custom_call.1} parent=1 // pred_fallthru
      _
    %47 = vsyncpa [#allocation3], 1
    %48 = vsyncpa [#allocation4], 1

</llo_original>
